<compile_context>
chip_gen: v7x
topology: tpu7x:2x2x1
jax: 0.10.0
libtpu: 0.0.40
codegen_flags: <defaults>
</compile_context>

<pallas_src>
import jax
import jax.numpy as jnp
from jax.experimental import pallas as pl
from jax.experimental.pallas import tpu as pltpu


def dense_layer_abun_kernel(x_ref, w_ref, b_ref, out_ref, sub_ref):
    # w_eff = weight * binary_concrete(beta) is precomputed in the wrapper.
    w_eff = w_ref[...]                                       # (1, F) f32, resident
    t = x_ref[...].astype(jnp.float32) * w_eff               # (TB, F) on the VPU
    bias = b_ref[0, 0]                                       # f32 scalar from SMEM

    # sub_log_odds: written back in x.dtype (largest HBM traffic term).
    sub_ref[...] = (t + bias).astype(sub_ref.dtype)          # (TB, F)
    # F.linear with out_feat == 1: a lane (XLU) reduction instead of a
    # (TB, F) x (F, 1) matmul that would waste >99.9% of the MXU.
    out_ref[...] = (jnp.sum(t, axis=-1, keepdims=True) + bias).astype(out_ref.dtype)


def _pick_block_rows(B, F, x_itemsize):
    """Batch-tile sizing (generation-aware).

    * VMEM budget / vmem_limit_bytes derived from the chip's VMEM capacity
      (128 MiB on v5e/v6e vs 64 MiB on v7x).
    * Streamed blocks target >= ~2 MiB to amortize per-step overhead and hit
      the HBM roofline.
    * TB rounded to the dtype's sublane pack factor (8 f32 / 16 bf16 / 32 i8).
    * Guarantees >= 2 grid steps when the batch allows it, so both v7x
      TensorCores are used under dimension_semantics=("parallel",).
    """
    try:
        vmem_cap = pltpu.get_tpu_info().vmem_capacity_bytes
    except Exception:  # pragma: no cover - conservative fallback
        vmem_cap = 64 * 1024 * 1024
    if vmem_cap >= 128 * 1024 * 1024:        # v5e / v6e
        budget, limit = 64 * 1024 * 1024, 96 * 1024 * 1024
    else:                                     # v7x (64 MiB VMEM)
        budget, limit = 24 * 1024 * 1024, 32 * 1024 * 1024

    sub = {1: 32, 2: 16}.get(x_itemsize, 8)   # sublane pack factor

    # Double-buffered streamed blocks per row: x in + sub out + log_odds out
    # (all in x.dtype now).  Resident w_eff is negligible.
    per_row = 2 * (F * x_itemsize) + 2 * (F * x_itemsize) + 2 * x_itemsize
    tb_vmem = max(budget // max(per_row, 1), sub)

    # ~2 MiB streamed x block target.
    tb_target = max((2 * 1024 * 1024) // max(F * x_itemsize, 1), sub)

    tb = min(tb_vmem, tb_target)

    # Ensure >= 2 grid steps whenever the batch is big enough (v7x megacore).
    if B >= 2 * sub:
        half = (B + 1) // 2
        tb = min(tb, max((half // sub) * sub, sub))

    if tb >= B:
        return B, limit
    return max(sub, (tb // sub) * sub), limit


def dense_layer_abun_forward(x, weight, bias, beta, k=1.0, hard=False):
    B, F = x.shape
    O = weight.shape[0]
    if O != 1:
        # The module's own sub_log_odds broadcast only makes sense for out_feat == 1.
        raise ValueError("DenseLayerAbun kernel requires out_feat == 1")

    # binary_concrete, deterministic (eval / use_noise=False) branch, hoisted
    # into the wrapper: a 1 x F op, the streamed bulk input x is untouched.
    z = jax.nn.sigmoid(beta.astype(jnp.float32) * jnp.float32(k))
    if hard:
        z = (z > 0.5).astype(jnp.float32)
    w_eff = (weight.astype(jnp.float32) * z[None, :]).reshape(1, F)

    bias2 = bias.reshape(1, 1).astype(jnp.float32)

    TB, vmem_limit = _pick_block_rows(B, F, x.dtype.itemsize)
    grid = (pl.cdiv(B, TB),)

    out_dtype = x.dtype
    out_isize = jnp.dtype(out_dtype).itemsize
    cost = pl.CostEstimate(
        flops=3 * B * F,
        transcendentals=0,
        bytes_accessed=(x.size * x.dtype.itemsize
                        + w_eff.size * 4 + 4
                        + (B * F + B) * out_isize),
    )

    log_odds, sub_log_odds = pl.pallas_call(
        dense_layer_abun_kernel,
        out_shape=(
            jax.ShapeDtypeStruct((B, O), out_dtype),
            jax.ShapeDtypeStruct((B, F), out_dtype),
        ),
        grid_spec=pl.GridSpec(
            grid=grid,
            in_specs=[
                pl.BlockSpec((TB, F), lambda i: (i, 0)),            # x (streamed)
                pl.BlockSpec((1, F), lambda i: (0, 0)),             # w_eff (resident)
                pl.BlockSpec(memory_space=pltpu.MemorySpace.SMEM),  # bias (scalar)
            ],
            out_specs=(
                pl.BlockSpec((TB, O), lambda i: (i, 0)),            # log_odds
                pl.BlockSpec((TB, F), lambda i: (i, 0)),            # sub_log_odds
            ),
        ),
        compiler_params=pltpu.CompilerParams(
            dimension_semantics=("parallel",),
            vmem_limit_bytes=vmem_limit,
        ),
        cost_estimate=cost,
    )(x, w_eff, bias2)

    # mirrors torch's x.squeeze(-1) for out_feat == 1
    return log_odds[:, 0], sub_log_odds


def _reference(x, weight, bias, beta, k=1.0, hard=False):
    z = jax.nn.sigmoid(beta * k)
    if hard:
        z = (z > 0.5).astype(jnp.float32)
    w_eff = weight * z[None, :]
    sub = x * w_eff.reshape(-1)[None, :] + bias
    out = x @ w_eff.T + bias
    return out[:, 0], sub


if __name__ == "__main__":
    B, in_feat, out_feat = 16, 32, 1
    key = jax.random.PRNGKey(0)
    k1, k2, k3, k4 = jax.random.split(key, 4)

    x = jax.random.normal(k1, (B, in_feat), dtype=jnp.float32)
    weight = jax.random.normal(k2, (out_feat, in_feat), dtype=jnp.float32) * 0.1
    bias = jax.random.normal(k3, (out_feat,), dtype=jnp.float32) * 0.1
    beta = jax.random.normal(k4, (in_feat,), dtype=jnp.float32)

    # soft (eval) path
    log_odds, sub_log_odds = dense_layer_abun_forward(x, weight, bias, beta, k=1.0)
    jax.block_until_ready((log_odds, sub_log_odds))
    ref_out, ref_sub = _reference(x, weight, bias, beta, k=1.0)
    assert log_odds.shape == (B,)
    assert sub_log_odds.shape == (B, in_feat)
    assert sub_log_odds.dtype == x.dtype
    assert jnp.allclose(log_odds, ref_out, atol=1e-5, rtol=1e-5)
    assert jnp.allclose(sub_log_odds, ref_sub, atol=1e-5, rtol=1e-5)

    # hard-threshold path
    log_odds_h, sub_h = dense_layer_abun_forward(x, weight, bias, beta, k=1.0, hard=True)
    jax.block_until_ready((log_odds_h, sub_h))
    ref_out_h, ref_sub_h = _reference(x, weight, bias, beta, k=1.0, hard=True)
    assert jnp.allclose(log_odds_h, ref_out_h, atol=1e-5, rtol=1e-5)
    assert jnp.allclose(sub_h, ref_sub_h, atol=1e-5, rtol=1e-5)

    print("KERNEL_OK")
</pallas_src>

<mosaic_0001>
module attributes {stable_mosaic.version = 11 : i64} {
  func.func @dense_layer_abun_kernel(%arg0: i32, %arg1: memref<8x32xf32, #tpu.memory_space<vmem>>, %arg2: memref<1x32xf32, #tpu.memory_space<vmem>>, %arg3: memref<1x1xf32, #tpu.memory_space<smem>>, %arg4: memref<8x1xf32, #tpu.memory_space<vmem>>, %arg5: memref<8x32xf32, #tpu.memory_space<vmem>>) attributes {dimension_semantics = [#tpu.dimension_semantics<parallel>], iteration_bounds = array<i64: 2>, scalar_prefetch = 0 : i64, scratch_operands = 0 : i64, tpu.core_type = #tpu.core_type<tc>, window_params = [{transform_indices = @transform_0, window_bounds = array<i64: 8, 32>}, {pipeline_mode = #tpu.pipeline_mode<synchronous>, transform_indices = @transform_1, window_bounds = array<i64: 1, 32>}, {transform_indices = @transform_2, window_bounds = array<i64: 1, 1>}, {transform_indices = @transform_3, window_bounds = array<i64: 8, 1>}, {transform_indices = @transform_4, window_bounds = array<i64: 8, 32>}]} {
    %c0 = arith.constant 0 : index
    %c0_0 = arith.constant 0 : index
    %0 = vector.load %arg2[%c0, %c0_0] : memref<1x32xf32, #tpu.memory_space<vmem>>, vector<1x32xf32>
    %c0_1 = arith.constant 0 : index
    %c0_2 = arith.constant 0 : index
    %1 = vector.load %arg1[%c0_1, %c0_2] : memref<8x32xf32, #tpu.memory_space<vmem>>, vector<8x32xf32>
    %2 = vector.broadcast %0 : vector<1x32xf32> to vector<8x32xf32>
    %3 = arith.mulf %1, %2 : vector<8x32xf32>
    %c0_3 = arith.constant 0 : index
    %c0_4 = arith.constant 0 : index
    %4 = memref.load %arg3[%c0_3, %c0_4] : memref<1x1xf32, #tpu.memory_space<smem>>
    %5 = vector.broadcast %4 : f32 to vector<8x32xf32>
    %6 = arith.addf %3, %5 : vector<8x32xf32>
    %c0_5 = arith.constant 0 : index
    %c0_6 = arith.constant 0 : index
    %7 = vector.load %arg5[%c0_5, %c0_6] : memref<8x32xf32, #tpu.memory_space<vmem>>, vector<8x32xf32>
    tpu.vector_store %arg5[%c0_5, %c0_6], %6 {strides = array<i32>} : memref<8x32xf32, #tpu.memory_space<vmem>>, vector<8x32xf32>,
    %cst = arith.constant dense<0.000000e+00> : vector<8xf32>
    %8 = vector.multi_reduction <add>, %3, %cst [1] : vector<8x32xf32> to vector<8xf32>
    %9 = vector.shape_cast %8 : vector<8xf32> to vector<8x1xf32>
    %10 = vector.broadcast %4 : f32 to vector<8x1xf32>
    %11 = arith.addf %9, %10 : vector<8x1xf32>
    %c0_7 = arith.constant 0 : index
    %c0_8 = arith.constant 0 : index
    %12 = vector.load %arg4[%c0_7, %c0_8] : memref<8x1xf32, #tpu.memory_space<vmem>>, vector<8x1xf32>
    tpu.vector_store %arg4[%c0_7, %c0_8], %11 {strides = array<i32>} : memref<8x1xf32, #tpu.memory_space<vmem>>, vector<8x1xf32>,
    return
  }
  func.func @transform_0(%arg0: i32) -> (i32, i32) {
    %c0_i32 = arith.constant 0 : i32
    %c0_i32_0 = arith.constant 0 : i32
    return %arg0, %c0_i32 : i32, i32
  }
  func.func @transform_1(%arg0: i32) -> (i32, i32) {
    %c0_i32 = arith.constant 0 : i32
    %c0_i32_0 = arith.constant 0 : i32
    %c0_i32_1 = arith.constant 0 : i32
    return %c0_i32, %c0_i32_0 : i32, i32
  }
  func.func @transform_2(%arg0: i32) -> (i32, i32) {
    %c0_i32 = arith.constant 0 : i32
    %c0_i32_0 = arith.constant 0 : i32
    %c0_i32_1 = arith.constant 0 : i32
    return %c0_i32, %c0_i32_0 : i32, i32
  }
  func.func @transform_3(%arg0: i32) -> (i32, i32) {
    %c0_i32 = arith.constant 0 : i32
    %c0_i32_0 = arith.constant 0 : i32
    return %arg0, %c0_i32 : i32, i32
  }
  func.func @transform_4(%arg0: i32) -> (i32, i32) {
    %c0_i32 = arith.constant 0 : i32
    %c0_i32_0 = arith.constant 0 : i32
    return %arg0, %c0_i32 : i32, i32
  }
}

</mosaic_0001>

<llo_original>
// kernel: tpu_custom_call.1
$region0: #{tpu_custom_call.1}
  #allocation0 [shape = 'u32[]', space=smem, size = 0x4, offset = 0x4, fixed_abs, tag = 'smem constant byte address 0x4 - core index']
  #allocation1 [shape = 'u32[144,128]{1,0:T(1,128)}', space=vmem, size = 0x12000, scoped, tag = 'internal scratch']
  #allocation2 [shape = 'f32[1,1]{1,0:T(1,128)S(6)}', space=smem, size = 0x200, scoped, tag = 'scoped memory for tpu_custom_call.1']
  %s0 = inlined_call_operand.hbm [shape: f32[16,32], index: 0, kind: input, shape index: {}]
  %s1 = inlined_call_operand.vmem [shape: f32[1,32], index: 1, kind: input, shape index: {}]
  %s2 = inlined_call_operand.<no memory space> [shape: f32[1,1], index: 2, kind: input, shape index: {}]
  %s3 = inlined_call_operand.vmem [shape: f32[16,1], index: 3, kind: output, shape index: {0}]
  %s4 = inlined_call_operand.hbm [shape: f32[16,32], index: 4, kind: output, shape index: {1}]
  %5 = xla_tuple %s3, %s4
  %s6 = sld [smem:[#allocation0]]
  $region57: #{tpu_custom_call.1} parent=0
    _
  %s8 = ssub.s32 1, %s6
  %s9 = scalar_select 0, %s8, %s6
  %10 = sst [smem:[#allocation2]] %s2
  $region1: #{tpu_custom_call.1} parent=0
    #allocation3 [shape = 'u8[8192]{0}', space=vmem, size = 0x2000, scoped, tag = 'input window, operand 0']
    #allocation4 [shape = 's32[2]{0}', space=sflag, size = 0x8, scoped, tag = 'scoped memory for tpu_custom_call.1']
    #allocation5 [shape = 's32[2]{0}', space=sflag, size = 0x8, scoped, tag = 'scoped memory for tpu_custom_call.1']
    #allocation6 [shape = 'u8[8192]{0}', space=vmem, size = 0x2000, scoped, tag = 'output window, operand 1']
    %11 = vsyncpa [#allocation4], 0
    %s12 = scalar_lea.sflag [#allocation4], 1
    %13 = vsyncpa %s12, 0
    %14 = vsyncpa [#allocation5], 0
    %s15 = scalar_lea.sflag [#allocation5], 1
    %16 = vsyncpa %s15, 0
    loop: start=0, step=1, limit=4
    $region2: #{tpu_custom_call.1} parent=1 // loop_pre_header
      _
    $region3: #{tpu_custom_call.1} parent=1 // loop_header
      %s18 = sphi 0, %s22
      %p19 = scmp.ge.s32.totalorder %s18, 4
      %s28 = sphi 0, %s30
      %s31 = sphi 0, %s28
      %s32 = sphi 0, %s31
      %s48 = sphi 0, %s32
      %s52 = sphi 0, %s52
      %s54 = sphi 0, %s52
      %s55 = sphi 0, %s54
      %s69 = sphi 0, %s55
      %s73 = sphi 0, %s73
      %s75 = sphi 0, %s73
      %s76 = sphi 0, %s75
      %s90 = sphi 0, %s76
      %s96 = sphi 0, %s98
      %s99 = sphi 0, %s96
      %s100 = sphi 0, %s99
      %s116 = sphi 0, %s100
      %s122 = sphi 0, %s124
      %s125 = sphi 0, %s122
      %s126 = sphi 0, %s125
      %s142 = sphi 0, %s126
    $region4: #{tpu_custom_call.1} parent=1 // loop_header_branch
      %21 = sbr.rel (%p19) target = $region8
    $region5: #{tpu_custom_call.1} parent=1 // loop_body
      %s23 = ssub.s32 %s18, 1
      %s24 = ssub.s32 %s18, 2
      %s25 = sadd.s32 %s18, 1
      %s26 = ssub.s32 %s18, %s25
      %p27 = scmp.eq.s32.totalorder %s26, 0
      %s29 = sadd.s32 %s28, 1
      %s30 = scalar_select %p27, %s28, %s29
      %p33 = pneg %p27
      %p34 = scmp.eq.s32.totalorder %s18, 1
      %p35 = por %p33, %p34
      %p36 = scmp.ne.s32.totalorder %s28, %s31
      %p37 = scmp.eq.s32.totalorder %s18, 0
      %p38 = por %p36, %p37
      %p39 = scmp.ne.s32.totalorder %s28, %s31
      %p40 = scmp.eq.s32.totalorder %s23, 1
      %p41 = por %p39, %p40
      %p42 = scmp.ne.s32.totalorder %s31, %s32
      %p43 = scmp.eq.s32.totalorder %s23, 0
      %p44 = por %p42, %p43
      %p45 = scmp.ne.s32.totalorder %s31, %s32
      %p46 = scmp.eq.s32.totalorder %s24, 1
      %p47 = por %p45, %p46
      %p49 = scmp.ne.s32.totalorder %s32, %s48
      %p50 = scmp.eq.s32.totalorder %s24, 0
      %p51 = por %p49, %p50
      %s53 = sadd.s32 %s52, 1
      %p56 = scmp.eq.s32.totalorder %s18, 1
      %p57 = scmp.ne.s32.totalorder %s52, %s54
      %p58 = scmp.eq.s32.totalorder %s18, 0
      %p59 = por %p57, %p58
      %p60 = scmp.ne.s32.totalorder %s52, %s54
      %p61 = scmp.eq.s32.totalorder %s23, 1
      %p62 = por %p60, %p61
      %p63 = scmp.ne.s32.totalorder %s54, %s55
      %p64 = scmp.eq.s32.totalorder %s23, 0
      %p65 = por %p63, %p64
      %p66 = scmp.ne.s32.totalorder %s54, %s55
      %p67 = scmp.eq.s32.totalorder %s24, 1
      %p68 = por %p66, %p67
      %p70 = scmp.ne.s32.totalorder %s55, %s69
      %p71 = scmp.eq.s32.totalorder %s24, 0
      %p72 = por %p70, %p71
      %s74 = sadd.s32 %s73, 1
      %p77 = scmp.eq.s32.totalorder %s18, 1
      %p78 = scmp.ne.s32.totalorder %s73, %s75
      %p79 = scmp.eq.s32.totalorder %s18, 0
      %p80 = por %p78, %p79
      %p81 = scmp.ne.s32.totalorder %s73, %s75
      %p82 = scmp.eq.s32.totalorder %s23, 1
      %p83 = por %p81, %p82
      %p84 = scmp.ne.s32.totalorder %s75, %s76
      %p85 = scmp.eq.s32.totalorder %s23, 0
      %p86 = por %p84, %p85
      %p87 = scmp.ne.s32.totalorder %s75, %s76
      %p88 = scmp.eq.s32.totalorder %s24, 1
      %p89 = por %p87, %p88
      %p91 = scmp.ne.s32.totalorder %s76, %s90
      %p92 = scmp.eq.s32.totalorder %s24, 0
      %p93 = por %p91, %p92
      %s94 = ssub.s32 %s18, %s25
      %p95 = scmp.eq.s32.totalorder %s94, 0
      %s97 = sadd.s32 %s96, 1
      %s98 = scalar_select %p95, %s96, %s97
      %p101 = pneg %p95
      %p102 = scmp.eq.s32.totalorder %s18, 1
      %p103 = por %p101, %p102
      %p104 = scmp.ne.s32.totalorder %s96, %s99
      %p105 = scmp.eq.s32.totalorder %s18, 0
      %p106 = por %p104, %p105
      %p107 = scmp.ne.s32.totalorder %s96, %s99
      %p108 = scmp.eq.s32.totalorder %s23, 1
      %p109 = por %p107, %p108
      %p110 = scmp.ne.s32.totalorder %s99, %s100
      %p111 = scmp.eq.s32.totalorder %s23, 0
      %p112 = por %p110, %p111
      %p113 = scmp.ne.s32.totalorder %s99, %s100
      %p114 = scmp.eq.s32.totalorder %s24, 1
      %p115 = por %p113, %p114
      %p117 = scmp.ne.s32.totalorder %s100, %s116
      %p118 = scmp.eq.s32.totalorder %s24, 0
      %p119 = por %p117, %p118
      %s120 = ssub.s32 %s18, %s25
      %p121 = scmp.eq.s32.totalorder %s120, 0
      %s123 = sadd.s32 %s122, 1
      %s124 = scalar_select %p121, %s122, %s123
      %p127 = pneg %p121
      %p128 = scmp.eq.s32.totalorder %s18, 1
      %p129 = por %p127, %p128
      %p130 = scmp.ne.s32.totalorder %s122, %s125
      %p131 = scmp.eq.s32.totalorder %s18, 0
      %p132 = por %p130, %p131
      %p133 = scmp.ne.s32.totalorder %s122, %s125
      %p134 = scmp.eq.s32.totalorder %s23, 1
      %p135 = por %p133, %p134
      %p136 = scmp.ne.s32.totalorder %s125, %s126
      %p137 = scmp.eq.s32.totalorder %s23, 0
      %p138 = por %p136, %p137
      %p139 = scmp.ne.s32.totalorder %s125, %s126
      %p140 = scmp.eq.s32.totalorder %s24, 1
      %p141 = por %p139, %p140
      %p143 = scmp.ne.s32.totalorder %s126, %s142
      %p144 = scmp.eq.s32.totalorder %s24, 0
      %p145 = por %p143, %p144
      %p146 = scmp.le.s32.totalorder 1, %s18
      %p147 = scmp.lt.s32.totalorder %s18, 3
      %p148 = pnand %p146, %p147
      %p149 = pneg %p148
      // Predicated region
      $region9: #{tpu_custom_call.1} parent=5 // pred_check
        _
      $region10: #{tpu_custom_call.1} parent=5 // pred_check_branch
        %151 = sbr.rel (%p148) target = $region12
      $region11: #{tpu_custom_call.1} parent=5 // pred_region
        %s152 = ssub.s32 %s18, 1
        // Predicated region
        $region13: #{tpu_custom_call.1} parent=11 // pred_check
          %p153 = pneg %p65
        $region14: #{tpu_custom_call.1} parent=11 // pred_check_branch
          %155 = sbr.rel (%p153) target = $region16
        $region15: #{tpu_custom_call.1} parent=11 // pred_region
          _
        $region16: #{tpu_custom_call.1} parent=11 // pred_fallthru
          _
        // Predicated region
        $region17: #{tpu_custom_call.1} parent=11 // pred_check
          %p156 = pneg %p86
        $region18: #{tpu_custom_call.1} parent=11 // pred_check_branch
          %158 = sbr.rel (%p156) target = $region20
        $region19: #{tpu_custom_call.1} parent=11 // pred_region
          _
        $region20: #{tpu_custom_call.1} parent=11 // pred_fallthru
          _
      $region12: #{tpu_custom_call.1} parent=5 // pred_fallthru
        _
      %p159 = scmp.lt.s32.totalorder %s18, 2
      // Predicated region
      $region21: #{tpu_custom_call.1} parent=5 // pred_check
        %p160 = pneg %p159
      $region22: #{tpu_custom_call.1} parent=5 // pred_check_branch
        %162 = sbr.rel (%p160) target = $region24
      $region23: #{tpu_custom_call.1} parent=5 // pred_region
        // Predicated region
        $region25: #{tpu_custom_call.1} parent=23 // pred_check
          %p163 = pneg %p38
        $region26: #{tpu_custom_call.1} parent=23 // pred_check_branch
          %165 = sbr.rel (%p163) target = $region28
        $region27: #{tpu_custom_call.1} parent=23 // pred_region
          %s166 = sand.u32 %s28, 1
          %s167 = scalar_lea.sflag [#allocation4], %s166
          %s168 = sand.u32 %s28, 1
          %s169 = smul.addr %s168, 8
          %s170 = scalar_lea.vmem [#allocation3], %s169
          %s172 = ssub.s32 128, 128
          %173 = vsyncadd %s167, %s172
          %s174 = smul.addr %s18, 128
          %s175 = scalar_lea.hbm %s0, %s174
          %s177 = sshll.u32 %s170, 4
          %s178 = int_to_ptr.vmem [resolvable:$true] %s177
          %180 = dma.hbm_to_vmem [thread:$0]  %s175, 128, %s178, %s167
        $region28: #{tpu_custom_call.1} parent=23 // pred_fallthru
          _
      $region24: #{tpu_custom_call.1} parent=5 // pred_fallthru
        _
      %p181 = scmp.le.s32.totalorder 1, %s18
      %p182 = scmp.lt.s32.totalorder %s18, 3
      %p183 = pnand %p181, %p182
      %p184 = pneg %p183
      // Predicated region
      $region29: #{tpu_custom_call.1} parent=5 // pred_check
        _
      $region30: #{tpu_custom_call.1} parent=5 // pred_check_branch
        %186 = sbr.rel (%p183) target = $region32
      $region31: #{tpu_custom_call.1} parent=5 // pred_region
        %s187 = ssub.s32 %s18, 1
        %s188 = sand.u32 %s31, 1
        %s189 = scalar_lea.sflag [#allocation4], %s188
        %s190 = sand.u32 %s31, 1
        %s191 = smul.addr %s190, 8
        %s192 = scalar_lea.vmem [#allocation3], %s191
        // Predicated region
        $region33: #{tpu_custom_call.1} parent=31 // pred_check
          %p193 = pneg %p44
        $region34: #{tpu_custom_call.1} parent=31 // pred_check_branch
          %195 = sbr.rel (%p193) target = $region36
        $region35: #{tpu_custom_call.1} parent=31 // pred_region
          %196 = dma.done %s189, 128
        $region36: #{tpu_custom_call.1} parent=31 // pred_fallthru
          _
        %s197 = sand.u32 %s31, 1
        %s198 = scalar_lea.sflag [#allocation4], %s197
        %s199 = sand.u32 %s31, 1
        %s200 = smul.addr %s199, 8
        %s201 = scalar_lea.vmem [#allocation3], %s200
        %p202 = pneg %p44
        %p203 = pneg %p41
        %p204 = pneg %p65
        %p205 = pneg %p62
        %p206 = pneg %p86
        %p207 = pneg %p83
        %p208 = pneg %p112
        %p209 = pneg %p109
        %p210 = scmp.lt.s32.totalorder %s23, 1
        %s211 = scalar_select %p210, %s23, 1
        %s212 = smul.addr %s211, 8
        %s213 = scalar_lea.vmem %s3, %s212
        %p214 = pneg %p138
        %p215 = pneg %p135
        %s216 = sand.u32 %s125, 1
        %s217 = scalar_lea.sflag [#allocation5], %s216
        %s218 = sand.u32 %s125, 1
        %s219 = smul.addr %s218, 8
        %s220 = scalar_lea.vmem [#allocation6], %s219
        %p221 = scmp.lt.s32.totalorder %s23, 1
        %s222 = scalar_select %p221, %s23, 1
        %s223 = smul.addr %s222, 8
        %s224 = scalar_lea.vmem %s3, %s223
        %v225 = vld [vmem:[%s1] sm:$0x1]
        %v226 = vld [vmem:[%s192] sm:$0xff]
        %v228 = vlaneseq
        %v229 = vshrl.u32 %v228, 7
        %v230 = vsub.s32 0, %v229
        %v231 = vrot.slane %v225, %v230
        %v233 = vmul.f32 %v226, %v231
        %s234 = sld [smem:[#allocation2]]
        %v235 = vstv %s234
        %v236 = vadd.f32 %v233, %v235
        %vm237 = vcmask 261120
        %238 = vst.msk [vmem:[%s220] sm:$0xff] %vm237, %v236
        %v239 = vsel %vm237, %v233, 0.0
        %240 = vadd.xlane.f32.xlu0 %v239
        %v241 = vpop.xlane.xlu0 %240
        %v242 = vadd.f32 %v241, %v235
        %vm243 = vcmask 7168
        %244 = vst.msk [vmem:[%s224] sm:$0xff] %vm243, %v242
        %p245 = scmp.lt.s32.totalorder %s23, 1
        %s246 = scalar_select %p245, %s23, 1
        %s247 = smul.addr %s246, 8
        %s248 = scalar_lea.vmem %s3, %s247
        %s249 = sand.u32 %s125, 1
        %s250 = scalar_lea.sflag [#allocation5], %s249
        %s251 = sand.u32 %s125, 1
        %s252 = smul.addr %s251, 8
        %s253 = scalar_lea.vmem [#allocation6], %s252
        // Predicated region
        $region37: #{tpu_custom_call.1} parent=31 // pred_check
          %p254 = pneg %p109
        $region38: #{tpu_custom_call.1} parent=31 // pred_check_branch
          %256 = sbr.rel (%p254) target = $region40
        $region39: #{tpu_custom_call.1} parent=31 // pred_region
          _
        $region40: #{tpu_custom_call.1} parent=31 // pred_fallthru
          _
        // Predicated region
        $region41: #{tpu_custom_call.1} parent=31 // pred_check
          %p257 = pneg %p135
        $region42: #{tpu_custom_call.1} parent=31 // pred_check_branch
          %259 = sbr.rel (%p257) target = $region44
        $region43: #{tpu_custom_call.1} parent=31 // pred_region
          %s261 = ssub.s32 128, 128
          %262 = vsyncadd %s250, %s261
          %s263 = smul.addr %s23, 128
          %s264 = scalar_lea.hbm %s4, %s263
          %s266 = sshll.u32 %s253, 4
          %s267 = int_to_ptr.vmem [resolvable:$true] %s266
          %269 = dma.vmem_to_hbm [thread:$0]  %s267, 128, %s264, %s250
        $region44: #{tpu_custom_call.1} parent=31 // pred_fallthru
          _
      $region32: #{tpu_custom_call.1} parent=5 // pred_fallthru
        _
      %p270 = scmp.le.s32.totalorder 2, %s18
      // Predicated region
      $region45: #{tpu_custom_call.1} parent=5 // pred_check
        %p271 = pneg %p270
      $region46: #{tpu_custom_call.1} parent=5 // pred_check_branch
        %273 = sbr.rel (%p271) target = $region48
      $region47: #{tpu_custom_call.1} parent=5 // pred_region
        %s274 = ssub.s32 %s18, 2
        // Predicated region
        $region49: #{tpu_custom_call.1} parent=47 // pred_check
          %p275 = pneg %p115
        $region50: #{tpu_custom_call.1} parent=47 // pred_check_branch
          %277 = sbr.rel (%p275) target = $region52
        $region51: #{tpu_custom_call.1} parent=47 // pred_region
          %p278 = scmp.lt.s32.totalorder %s24, 1
          %s279 = scalar_select %p278, %s24, 1
          %s280 = smul.addr %s279, 8
          %s281 = scalar_lea.vmem %s3, %s280
        $region52: #{tpu_custom_call.1} parent=47 // pred_fallthru
          _
        // Predicated region
        $region53: #{tpu_custom_call.1} parent=47 // pred_check
          %p282 = pneg %p141
        $region54: #{tpu_custom_call.1} parent=47 // pred_check_branch
          %284 = sbr.rel (%p282) target = $region56
        $region55: #{tpu_custom_call.1} parent=47 // pred_region
          %s285 = sand.u32 %s126, 1
          %s286 = scalar_lea.sflag [#allocation5], %s285
          %s287 = sand.u32 %s126, 1
          %s288 = smul.addr %s287, 8
          %s289 = scalar_lea.vmem [#allocation6], %s288
          %290 = dma.done %s286, 128
        $region56: #{tpu_custom_call.1} parent=47 // pred_fallthru
          _
      $region48: #{tpu_custom_call.1} parent=5 // pred_fallthru
        _
    $region6: #{tpu_custom_call.1} parent=1 // loop_footer
      %s22 = sadd.s32 1, %s18
    $region7: #{tpu_custom_call.1} parent=1 // loop_footer_branch
      %17 = sbr.rel target = $region3
    $region8: #{tpu_custom_call.1} parent=1 // loop_exit
      _
    %291 = vsyncpa [#allocation4], 1
    %s292 = scalar_lea.sflag [#allocation4], 1
    %293 = vsyncpa %s292, 1
    %294 = vsyncpa [#allocation5], 1
    %s295 = scalar_lea.sflag [#allocation5], 1
    %296 = vsyncpa %s295, 1

</llo_original>
